<compile_context>
chip_gen: v5e
topology: v5e:2x2
jax: 0.10.0
libtpu: 0.0.40
codegen_flags: <defaults>
</compile_context>

<pallas_src>
import math

import jax
import jax.numpy as jnp
from jax.experimental import pallas as pl
from jax.experimental.pallas import tpu as pltpu


_LANE_CANDIDATES = (2048, 1024, 512, 256, 128)
_DEFAULT_TILE_BYTES = 4 * 1024 * 1024     # per array, per grid step
_VMEM_LIMIT_BYTES = 48 * 1024 * 1024      # 3 arrays x 2 bufs x 4 MiB = 24 MiB + headroom
_MIN_GRID_STEPS = 4                       # guarantee pipeline overlap on big inputs


def _welsch_kernel(x_ref, y_ref, o_ref):
    # Elementwise hot path on the current VMEM tile. Casts (if any) happen
    # in-kernel so the wrapper never adds extra HBM passes.
    xv = x_ref[...].astype(jnp.float32)
    yv = y_ref[...].astype(jnp.float32)
    # Keep 1 - exp(...) (not expm1) for parity with the PyTorch module.
    o_ref[...] = (1.0 - jnp.exp(-0.5 * jnp.abs(xv - yv))).astype(o_ref.dtype)


def _welsch_scalar_kernel(x_ref, s_ref, o_ref):
    # One operand was a broadcast scalar: read it once from SMEM and broadcast
    # on-chip instead of materializing an expanded copy in HBM.
    sv = s_ref[0, 0]
    xv = x_ref[...].astype(jnp.float32)
    o_ref[...] = (1.0 - jnp.exp(-0.5 * jnp.abs(xv - sv))).astype(o_ref.dtype)


def _jax_ref_math(x, y, out_dtype):
    xv = x.astype(jnp.float32)
    yv = y.astype(jnp.float32)
    return (1.0 - jnp.exp(-0.5 * jnp.abs(xv - yv))).astype(out_dtype)


def _choose_tiling(rows, lanes, itemsizes, target_tile_bytes):
    """Pick a sublane-aligned row block and 1-D grid over the (rows, lanes) view."""
    sublane_unit = max(8, 32 // min(itemsizes))   # 8 f32 / 16 bf16 / 32 int8
    max_item = max(itemsizes)

    tr = (target_tile_bytes // (lanes * max_item)) // sublane_unit * sublane_unit
    tr = max(sublane_unit, tr)

    # Never collapse to a single grid step for non-trivial inputs: with one
    # step the DMA-in / compute / DMA-out phases fully serialize.
    if rows * lanes * max_item > (1 << 20):
        cap = max(sublane_unit,
                  (rows // _MIN_GRID_STEPS) // sublane_unit * sublane_unit)
        tr = min(tr, cap)

    block_rows = min(tr, rows)   # either multiple of sublane_unit or full extent
    grid = (pl.cdiv(rows, block_rows),)
    return block_rows, grid


def _compiler_params():
    return pltpu.CompilerParams(
        dimension_semantics=("parallel",),
        vmem_limit_bytes=_VMEM_LIMIT_BYTES,
    )


def _run_pair(x2, y2, out_dtype, target_tile_bytes):
    rows, lanes = x2.shape
    itemsizes = (jnp.dtype(x2.dtype).itemsize,
                 jnp.dtype(y2.dtype).itemsize,
                 jnp.dtype(out_dtype).itemsize)
    block_rows, grid = _choose_tiling(rows, lanes, itemsizes, target_tile_bytes)
    n = rows * lanes
    cost = pl.CostEstimate(
        flops=4 * n,
        transcendentals=n,
        bytes_accessed=n * (itemsizes[0] + itemsizes[1] + itemsizes[2]),
    )
    return pl.pallas_call(
        _welsch_kernel,
        out_shape=jax.ShapeDtypeStruct((rows, lanes), out_dtype),
        grid_spec=pltpu.PrefetchScalarGridSpec(
            num_scalar_prefetch=0,
            grid=grid,
            in_specs=[
                pl.BlockSpec((block_rows, lanes), lambda i: (i, 0)),
                pl.BlockSpec((block_rows, lanes), lambda i: (i, 0)),
            ],
            out_specs=pl.BlockSpec((block_rows, lanes), lambda i: (i, 0)),
        ),
        compiler_params=_compiler_params(),
        cost_estimate=cost,
    )(x2, y2)


def _run_scalar(x2, scalar, out_dtype, target_tile_bytes):
    rows, lanes = x2.shape
    itemsizes = (jnp.dtype(x2.dtype).itemsize,
                 jnp.dtype(out_dtype).itemsize)
    block_rows, grid = _choose_tiling(rows, lanes, itemsizes, target_tile_bytes)
    n = rows * lanes
    s11 = jnp.asarray(scalar, jnp.float32).reshape(1, 1)
    cost = pl.CostEstimate(
        flops=4 * n,
        transcendentals=n,
        bytes_accessed=n * (itemsizes[0] + itemsizes[1]),
    )
    return pl.pallas_call(
        _welsch_scalar_kernel,
        out_shape=jax.ShapeDtypeStruct((rows, lanes), out_dtype),
        grid_spec=pltpu.PrefetchScalarGridSpec(
            num_scalar_prefetch=0,
            grid=grid,
            in_specs=[
                pl.BlockSpec((block_rows, lanes), lambda i: (i, 0)),
                pl.BlockSpec(memory_space=pltpu.MemorySpace.SMEM),
            ],
            out_specs=pl.BlockSpec((block_rows, lanes), lambda i: (i, 0)),
        ),
        compiler_params=_compiler_params(),
        cost_estimate=cost,
    )(x2, s11)


def welsch_loss(x, y, *, target_tile_bytes=_DEFAULT_TILE_BYTES):
    """Pallas TPU implementation of WelschLoss.forward(x, y)."""
    x = jnp.asarray(x)
    y = jnp.asarray(y)
    out_shape = jnp.broadcast_shapes(x.shape, y.shape)
    out_dtype = jnp.result_type(x.dtype, y.dtype)
    if not jnp.issubdtype(out_dtype, jnp.floating):
        out_dtype = jnp.float32

    n = math.prod(out_shape)
    if n == 0:
        return jnp.zeros(out_shape, out_dtype)

    # ---- broadcast handling (avoid expanding operands in HBM) --------------
    scalar_small = None
    if x.shape == y.shape:
        pass
    elif y.size == 1:
        scalar_small = y
        x = jnp.broadcast_to(x, out_shape)     # no-op / reshape only
    elif x.size == 1:
        scalar_small = x
        x = jnp.broadcast_to(y, out_shape)     # abs() is symmetric, order irrelevant
    else:
        # TODO(synk): general (non-scalar) broadcasting still materializes the
        # expanded operands; only the scalar case is broadcast in-kernel.
        x, y = jnp.broadcast_arrays(x, y)

    # ---- lane-dense flat 2D view + optional small tail ----------------------
    lanes = next((c for c in _LANE_CANDIDATES if n % c == 0), None)
    if lanes is None:
        lanes = 512 if n >= 512 else 128
    n_bulk = (n // lanes) * lanes
    n_tail = n - n_bulk

    fx = x.reshape(-1)
    fy = None if scalar_small is not None else y.reshape(-1)

    if n_bulk == 0:
        # Tiny input (< 128 elements): a single fused XLA op is already optimal.
        ty = (jnp.broadcast_to(scalar_small.reshape(-1), fx.shape)
              if scalar_small is not None else fy)
        return _jax_ref_math(fx, ty, out_dtype).reshape(out_shape)

    rows = n_bulk // lanes
    bx = fx[:n_bulk].reshape(rows, lanes)
    if scalar_small is not None:
        bulk = _run_scalar(bx, scalar_small, out_dtype, target_tile_bytes)
    else:
        by = fy[:n_bulk].reshape(rows, lanes)
        bulk = _run_pair(bx, by, out_dtype, target_tile_bytes)

    if n_tail == 0:
        return bulk.reshape(out_shape)

    # < lanes leftover elements: plain JAX (no pad of the inputs, no slice of
    # the full output — only the tiny tail is touched outside the kernel).
    tx = fx[n_bulk:]
    ty = (jnp.broadcast_to(scalar_small.reshape(-1), tx.shape)
          if scalar_small is not None else fy[n_bulk:])
    tail = _jax_ref_math(tx, ty, out_dtype)
    return jnp.concatenate([bulk.reshape(-1), tail]).reshape(out_shape)


def _ref(x, y):
    return 1.0 - jnp.exp(-0.5 * jnp.abs(x - y))


if __name__ == "__main__":
    key = jax.random.PRNGKey(0)
    kx, ky = jax.random.split(key)

    # Small NCHW inputs consistent with an image-loss module (fast path).
    x = jax.random.normal(kx, (2, 4, 16, 16), dtype=jnp.float32)
    y = jax.random.normal(ky, (2, 4, 16, 16), dtype=jnp.float32)
    out = welsch_loss(x, y)
    jax.block_until_ready(out)
    ref = _ref(x, y)
    assert out.shape == ref.shape and out.dtype == ref.dtype
    assert jnp.allclose(out, ref, atol=1e-6, rtol=1e-6)

    # Multi-step grid path (exercises pipelined double-buffering).
    kx2, ky2 = jax.random.split(ky)
    x2 = jax.random.normal(kx2, (8, 8, 128, 128), dtype=jnp.float32)
    y2 = jax.random.normal(ky2, (8, 8, 128, 128), dtype=jnp.float32)
    out2 = welsch_loss(x2, y2)
    jax.block_until_ready(out2)
    assert jnp.allclose(out2, _ref(x2, y2), atol=1e-6, rtol=1e-6)

    # Scalar broadcast operand -> in-kernel SMEM broadcast (no HBM expansion).
    ys = jnp.float32(0.25)
    out3 = welsch_loss(x, ys)
    jax.block_until_ready(out3)
    assert jnp.allclose(out3, _ref(x, ys), atol=1e-6, rtol=1e-6)

    # Awkward size (not a multiple of 128) -> aligned bulk kernel + JAX tail.
    kx3, ky3 = jax.random.split(kx2)
    x4 = jax.random.normal(kx3, (3, 5, 7, 11), dtype=jnp.float32)
    y4 = jax.random.normal(ky3, (3, 5, 7, 11), dtype=jnp.float32)
    out4 = welsch_loss(x4, y4)
    jax.block_until_ready(out4)
    assert jnp.allclose(out4, _ref(x4, y4), atol=1e-6, rtol=1e-6)

    print("KERNEL_OK")
</pallas_src>

<mosaic_0001>
module attributes {stable_mosaic.version = 11 : i64} {
  func.func @_welsch_kernel(%arg0: i32, %arg1: memref<1x2048xf32, #tpu.memory_space<vmem>>, %arg2: memref<1x2048xf32, #tpu.memory_space<vmem>>, %arg3: memref<1x2048xf32, #tpu.memory_space<vmem>>) attributes {dimension_semantics = [#tpu.dimension_semantics<parallel>], iteration_bounds = array<i64: 1>, scalar_prefetch = 0 : i64, scratch_operands = 0 : i64, tpu.core_type = #tpu.core_type<tc>, window_params = [{transform_indices = @transform_0, window_bounds = array<i64: 1, 2048>}, {transform_indices = @transform_1, window_bounds = array<i64: 1, 2048>}, {transform_indices = @transform_2, window_bounds = array<i64: 1, 2048>}]} {
    %c0 = arith.constant 0 : index
    %c0_0 = arith.constant 0 : index
    %0 = vector.load %arg1[%c0, %c0_0] : memref<1x2048xf32, #tpu.memory_space<vmem>>, vector<1x2048xf32>
    %c0_1 = arith.constant 0 : index
    %c0_2 = arith.constant 0 : index
    %1 = vector.load %arg2[%c0_1, %c0_2] : memref<1x2048xf32, #tpu.memory_space<vmem>>, vector<1x2048xf32>
    %2 = arith.subf %0, %1 : vector<1x2048xf32>
    %3 = math.absf %2 : vector<1x2048xf32>
    %cst = arith.constant -5.000000e-01 : f32
    %4 = vector.broadcast %cst : f32 to vector<1x2048xf32>
    %5 = arith.mulf %4, %3 : vector<1x2048xf32>
    %6 = math.exp %5 : vector<1x2048xf32>
    %cst_3 = arith.constant 1.000000e+00 : f32
    %7 = vector.broadcast %cst_3 : f32 to vector<1x2048xf32>
    %8 = arith.subf %7, %6 : vector<1x2048xf32>
    %c0_4 = arith.constant 0 : index
    %c0_5 = arith.constant 0 : index
    %9 = vector.load %arg3[%c0_4, %c0_5] : memref<1x2048xf32, #tpu.memory_space<vmem>>, vector<1x2048xf32>
    tpu.vector_store %arg3[%c0_4, %c0_5], %8 {strides = array<i32>} : memref<1x2048xf32, #tpu.memory_space<vmem>>, vector<1x2048xf32>,
    return
  }
  func.func @transform_0(%arg0: i32) -> (i32, i32) {
    %c0_i32 = arith.constant 0 : i32
    %c0_i32_0 = arith.constant 0 : i32
    return %arg0, %c0_i32 : i32, i32
  }
  func.func @transform_1(%arg0: i32) -> (i32, i32) {
    %c0_i32 = arith.constant 0 : i32
    %c0_i32_0 = arith.constant 0 : i32
    return %arg0, %c0_i32 : i32, i32
  }
  func.func @transform_2(%arg0: i32) -> (i32, i32) {
    %c0_i32 = arith.constant 0 : i32
    %c0_i32_0 = arith.constant 0 : i32
    return %arg0, %c0_i32 : i32, i32
  }
}

</mosaic_0001>

<llo_original>
// kernel: tpu_custom_call.1
$region0: #{tpu_custom_call.1}
  #allocation0 [shape = 'u32[]', space=smem, size = 0x4, offset = 0x4, fixed_abs, tag = 'smem constant byte address 0x4 - core index']
  #allocation1 [shape = 'u32[72,128]{1,0:T(1,128)}', space=vmem, size = 0x9000, scoped, tag = 'internal scratch']
  %s0 = inlined_call_operand.hbm [shape: f32[1,2048], index: 0, kind: input, shape index: {}]
  %s1 = inlined_call_operand.hbm [shape: f32[1,2048], index: 1, kind: input, shape index: {}]
  %s2 = inlined_call_operand.hbm [shape: f32[1,2048], index: 2, kind: output, shape index: {}]
  %s3 = sld [smem:[#allocation0]]
  $region26: #{tpu_custom_call.1} parent=0
    _
  %s5 = ssub.s32 1, %s3
  %s6 = scalar_select 0, %s5, %s3
  $region1: #{tpu_custom_call.1} parent=0
    #allocation2 [shape = 'u8[8192]{0}', space=vmem, size = 0x2000, scoped, tag = 'input window, operand 0, single buffered']
    #allocation3 [shape = 's32[1]{0}', space=sflag, size = 0x4, scoped, tag = 'scoped memory for tpu_custom_call.1']
    #allocation4 [shape = 's32[1]{0}', space=sflag, size = 0x4, scoped, tag = 'scoped memory for tpu_custom_call.1']
    #allocation5 [shape = 'u8[8192]{0}', space=vmem, size = 0x2000, scoped, tag = 'input window, operand 1, single buffered']
    #allocation6 [shape = 's32[1]{0}', space=sflag, size = 0x4, scoped, tag = 'scoped memory for tpu_custom_call.1']
    #allocation7 [shape = 'u8[8192]{0}', space=vmem, size = 0x2000, scoped, tag = 'output window, operand 0, single buffered']
    %7 = vsyncpa [#allocation3], 0
    %8 = vsyncpa [#allocation6], 0
    %9 = vsyncpa [#allocation4], 0
    // Predicated region
    $region2: #{tpu_custom_call.1} parent=1 // pred_check
      _
    $region3: #{tpu_custom_call.1} parent=1 // pred_check_branch
      %11 = sbr.rel (0) target = $region5
    $region4: #{tpu_custom_call.1} parent=1 // pred_region
      %13 = vsyncadd [#allocation3], 0
      %s15 = sshll.u32 %s0, 4
      %s16 = int_to_ptr.hbm [resolvable:$true] %s15
      %s17 = sshll.u32 [#allocation2], 4
      %s18 = int_to_ptr.vmem [resolvable:$true] %s17
      %20 = dma.hbm_to_vmem [thread:$0]  %s16, 256, %s18, [#allocation3]
    $region5: #{tpu_custom_call.1} parent=1 // pred_fallthru
      _
    // Predicated region
    $region6: #{tpu_custom_call.1} parent=1 // pred_check
      _
    $region7: #{tpu_custom_call.1} parent=1 // pred_check_branch
      %22 = sbr.rel (0) target = $region9
    $region8: #{tpu_custom_call.1} parent=1 // pred_region
      %24 = vsyncadd [#allocation6], 0
      %s26 = sshll.u32 %s1, 4
      %s27 = int_to_ptr.hbm [resolvable:$true] %s26
      %s28 = sshll.u32 [#allocation5], 4
      %s29 = int_to_ptr.vmem [resolvable:$true] %s28
      %31 = dma.hbm_to_vmem [thread:$0]  %s27, 256, %s29, [#allocation6]
    $region9: #{tpu_custom_call.1} parent=1 // pred_fallthru
      _
    // Predicated region
    $region10: #{tpu_custom_call.1} parent=1 // pred_check
      _
    $region11: #{tpu_custom_call.1} parent=1 // pred_check_branch
      %33 = sbr.rel (0) target = $region13
    $region12: #{tpu_custom_call.1} parent=1 // pred_region
      %35 = dma.done [#allocation3], 256
    $region13: #{tpu_custom_call.1} parent=1 // pred_fallthru
      _
    // Predicated region
    $region14: #{tpu_custom_call.1} parent=1 // pred_check
      _
    $region15: #{tpu_custom_call.1} parent=1 // pred_check_branch
      %37 = sbr.rel (0) target = $region17
    $region16: #{tpu_custom_call.1} parent=1 // pred_region
      %39 = dma.done [#allocation6], 256
    $region17: #{tpu_custom_call.1} parent=1 // pred_fallthru
      _
    %v40 = vld [vmem:[#allocation2] sm:$0xff]
    %v41 = vld [vmem:[#allocation2 + $0x8] sm:$0xff]
    %v42 = vld [vmem:[#allocation5] sm:$0xff]
    %v43 = vld [vmem:[#allocation5 + $0x8] sm:$0xff]
    %v44 = vsub.f32 %v40, %v42
    %v45 = vsub.f32 %v41, %v43
    %v46 = vand.u32 2147483647, %v44
    %v47 = vand.u32 2147483647, %v45
    %v48 = vmul.f32 %v46, -0.5
    %v49 = vmul.f32 %v47, -0.5
    %v50 = vmul.f32 %v48, 1.442695
    %v51 = vpow.pop %v50
    %v52 = vmul.f32 %v49, 1.442695
    %v53 = vpow.pop %v52
    %v54 = vsub.f32 1.0, %v51
    %v55 = vsub.f32 1.0, %v53
    %56 = vst [vmem:[#allocation7] sm:$0xff] %v54
    %57 = vst [vmem:[#allocation7 + $0x8] sm:$0xff] %v55
    // Predicated region
    $region18: #{tpu_custom_call.1} parent=1 // pred_check
      _
    $region19: #{tpu_custom_call.1} parent=1 // pred_check_branch
      %59 = sbr.rel (0) target = $region21
    $region20: #{tpu_custom_call.1} parent=1 // pred_region
      %61 = vsyncadd [#allocation4], 0
      %s63 = sshll.u32 [#allocation7], 4
      %s64 = int_to_ptr.vmem [resolvable:$true] %s63
      %s65 = sshll.u32 %s2, 4
      %s66 = int_to_ptr.hbm [resolvable:$true] %s65
      %68 = dma.vmem_to_hbm [thread:$0]  %s64, 256, %s66, [#allocation4]
    $region21: #{tpu_custom_call.1} parent=1 // pred_fallthru
      _
    // Predicated region
    $region22: #{tpu_custom_call.1} parent=1 // pred_check
      _
    $region23: #{tpu_custom_call.1} parent=1 // pred_check_branch
      %70 = sbr.rel (0) target = $region25
    $region24: #{tpu_custom_call.1} parent=1 // pred_region
      %72 = dma.done [#allocation4], 256
    $region25: #{tpu_custom_call.1} parent=1 // pred_fallthru
      _
    %73 = vsyncpa [#allocation3], 1
    %74 = vsyncpa [#allocation6], 1
    %75 = vsyncpa [#allocation4], 1

</llo_original>
